<compile_context>
chip_gen: v6e
topology: v6e:2x2x1
jax: 0.10.0
libtpu: 0.0.40
codegen_flags: <defaults>
</compile_context>

<pallas_src>
import functools

import jax
import jax.numpy as jnp
from jax import lax
from jax.experimental import pallas as pl
from jax.experimental.pallas import tpu as pltpu


def _round_up(x, m):
    return ((x + m - 1) // m) * m


def simulator_kernel(
    s_ref,    # (TB, S)           bf16  state tile
    a_ref,    # (TB, 1)           i32   agent-action indices
    wi_ref,   # (S, H_pad)        bf16  linear_i2h weight (transposed)
    bi_ref,   # (1, H_pad)        f32   linear_i2h bias
    emb_ref,  # (A, H_pad)        bf16  agent embedding table
    wh_ref,   # (H_pad, HEAD_pad) bf16  fused head weight [reward|term|logits|pad]
    bh_ref,   # (1, HEAD_pad)     f32   fused head bias
    out_ref,  # (TB, HEAD_pad)    f32   fused output tile
    *,
    reward_size: int,
    termination_size: int,
    user_action_size: int,
    logit_lo: int,    # 128-aligned start of the column group holding logits
    logit_hi: int,    # 128-aligned end   of the column group holding logits
):
    s = s_ref[...]          # bf16
    a = a_ref[...]          # (TB, 1) int32

    # h_s = linear_i2h(s): bf16 MXU operands, f32 accumulation.
    h_s = jnp.dot(s, wi_ref[...], preferred_element_type=jnp.float32)

    # h_a = agent_emb(a).squeeze(1)  -> one-hot(a) @ emb_table (MXU gather).
    # TODO(synk): switch to scalar-prefetch row gather (PrefetchScalarGridSpec +
    # pl.Element) if agent_action_size grows to the thousands.
    num_actions = emb_ref.shape[0]
    iota_a = lax.broadcasted_iota(jnp.int32, (a.shape[0], num_actions), 1)
    onehot = (a == iota_a).astype(jnp.bfloat16)
    h_a = jnp.dot(onehot, emb_ref[...], preferred_element_type=jnp.float32)

    # h = tanh(h_s + h_a + bias) — elementwise kept in f32 (no bf16 VPU/EUP on v5e).
    h = jnp.tanh(h_s + h_a + bi_ref[...])

    # Single fused, lane-dense head matmul: [reward | term | action_logits | pad].
    fused = jnp.dot(h.astype(jnp.bfloat16), wh_ref[...],
                    preferred_element_type=jnp.float32) + bh_ref[...]

    # log_softmax over the user-action logit columns only.  Softmax math is
    # restricted to the 128-aligned column group(s) containing the logits.
    off = reward_size + termination_size
    slab = fused[:, logit_lo:logit_hi]                      # static, lane-aligned slice
    col = lax.broadcasted_iota(jnp.int32, slab.shape, 1) + logit_lo
    slab_mask = (col >= off) & (col < off + user_action_size)

    neg_big = jnp.float32(-1e30)
    masked = jnp.where(slab_mask, slab, neg_big)
    m = jnp.max(masked, axis=-1, keepdims=True)
    p = jnp.exp(masked - m)                                  # exp on masked values only
    lse = jnp.log(jnp.sum(p, axis=-1, keepdims=True)) + m

    # Logit columns get log-softmax, reward/term columns pass through raw.
    col_full = lax.broadcasted_iota(jnp.int32, fused.shape, 1)
    full_mask = (col_full >= off) & (col_full < off + user_action_size)
    out_ref[...] = jnp.where(full_mask, fused - lse, fused)


def prepare_params(params):
    """One-time weight padding / head fusion / bf16 cast.

    Hoisted out of the per-call path: call once at init (or whenever the
    params change) and pass the result to simulator_forward.
    """
    wi, bi, emb = params["wi"], params["bi"], params["emb"]
    wr, br = params["wr"], params["br"]
    wt, bt = params["wt"], params["bt"]
    wa, ba = params["wa"], params["ba"]

    state_size, hidden = wi.shape
    agent_action_size = emb.shape[0]
    reward_size = wr.shape[1]
    term_size = wt.shape[1]
    user_action_size = wa.shape[1]
    head = reward_size + term_size + user_action_size

    H_pad = _round_up(hidden, 128)
    HEAD_pad = _round_up(head, 128)

    wi_p = jnp.zeros((state_size, H_pad), jnp.bfloat16)
    wi_p = wi_p.at[:, :hidden].set(wi.astype(jnp.bfloat16))
    bi_p = jnp.zeros((1, H_pad), jnp.float32).at[:, :hidden].set(bi)
    emb_p = jnp.zeros((agent_action_size, H_pad), jnp.bfloat16)
    emb_p = emb_p.at[:, :hidden].set(emb.astype(jnp.bfloat16))

    # Fused head weight/bias: columns [reward | term | action_logits | pad].
    wh = jnp.zeros((H_pad, HEAD_pad), jnp.bfloat16)
    wh = wh.at[:hidden, :reward_size].set(wr.astype(jnp.bfloat16))
    wh = wh.at[:hidden, reward_size:reward_size + term_size].set(wt.astype(jnp.bfloat16))
    wh = wh.at[:hidden, reward_size + term_size:head].set(wa.astype(jnp.bfloat16))
    bh = jnp.zeros((1, HEAD_pad), jnp.float32)
    bh = bh.at[:, :reward_size].set(br)
    bh = bh.at[:, reward_size:reward_size + term_size].set(bt)
    bh = bh.at[:, reward_size + term_size:head].set(ba)

    arrs = dict(wi=wi_p, bi=bi_p, emb=emb_p, wh=wh, bh=bh)
    meta = dict(state_size=state_size, hidden=hidden,
                agent_action_size=agent_action_size,
                reward_size=reward_size, termination_size=term_size,
                user_action_size=user_action_size,
                head=head, H_pad=H_pad, HEAD_pad=HEAD_pad)
    return arrs, meta


def simulator_forward(s, a, prepared, *, block_b=1024):
    """s: (B, state_size) f32, a: (B, 1) int. Returns (reward, term, log_action)."""
    arrs, meta = prepared
    B = s.shape[0]
    state_size = meta["state_size"]
    agent_action_size = meta["agent_action_size"]
    reward_size = meta["reward_size"]
    term_size = meta["termination_size"]
    user_action_size = meta["user_action_size"]
    head = meta["head"]
    H_pad = meta["H_pad"]
    HEAD_pad = meta["HEAD_pad"]

    # Batch tile selection: default 1024 tiles, and force >= 2 grid steps for
    # mid/large batches so the "parallel" batch axis can shard across both
    # v7x TensorCores (no effect on 1-TC v5e/v6e).
    B8 = _round_up(B, 8)
    if B8 > 8:
        TB = min(block_b, _round_up((B8 + 1) // 2, 8))
    else:
        TB = B8
    B_pad = _round_up(B8, TB)

    # Only batch-dim padding of s; the state dim stays un-padded (BlockSpec
    # last dim == full array dim satisfies the (8,128) rule).
    if B_pad == B:
        s_p = s.astype(jnp.bfloat16)
        a_p = a.astype(jnp.int32)
    else:
        s_p = jnp.zeros((B_pad, state_size), jnp.bfloat16)
        s_p = s_p.at[:B, :].set(s.astype(jnp.bfloat16))
        a_p = jnp.zeros((B_pad, 1), jnp.int32).at[:B, :].set(a.astype(jnp.int32))

    # 128-aligned column group containing the user-action logits.
    off = reward_size + term_size
    logit_lo = (off // 128) * 128
    logit_hi = _round_up(off + user_action_size, 128)

    grid = (B_pad // TB,)

    kernel = functools.partial(
        simulator_kernel,
        reward_size=reward_size,
        termination_size=term_size,
        user_action_size=user_action_size,
        logit_lo=logit_lo,
        logit_hi=logit_hi,
    )

    # VMEM budget: resident weights + double-buffered batch tiles + in-kernel
    # intermediates + headroom, capped at v7x's 64 MiB physical VMEM.
    lane = 128
    bf16, f32 = 2, 4

    def _lanes(n):
        return _round_up(max(n, 1), lane)

    weight_bytes = ((state_size * H_pad + agent_action_size * H_pad
                     + H_pad * HEAD_pad) * bf16 + (H_pad + HEAD_pad) * f32)
    tile_bytes = 2 * (TB * _lanes(state_size) * bf16   # s (bf16, double-buffered)
                      + TB * lane * f32                # a (1 col lane-pads to 128)
                      + TB * HEAD_pad * f32)           # fused output
    interm_bytes = 12 * TB * max(H_pad, HEAD_pad, _lanes(agent_action_size)) * f32
    vmem_limit = min(weight_bytes + tile_bytes + interm_bytes + (8 << 20), 64 << 20)

    out = pl.pallas_call(
        kernel,
        grid=grid,
        in_specs=[
            pl.BlockSpec((TB, state_size), lambda i: (i, 0)),          # s: blocked on batch
            pl.BlockSpec((TB, 1), lambda i: (i, 0)),                   # a: blocked on batch
            pl.BlockSpec((state_size, H_pad), lambda i: (0, 0)),       # wi: resident
            pl.BlockSpec((1, H_pad), lambda i: (0, 0)),                # bi: resident
            pl.BlockSpec((agent_action_size, H_pad), lambda i: (0, 0)),# emb: resident
            pl.BlockSpec((H_pad, HEAD_pad), lambda i: (0, 0)),         # fused head W: resident
            pl.BlockSpec((1, HEAD_pad), lambda i: (0, 0)),             # fused head b: resident
        ],
        out_specs=pl.BlockSpec((TB, HEAD_pad), lambda i: (i, 0)),
        out_shape=jax.ShapeDtypeStruct((B_pad, HEAD_pad), jnp.float32),
        compiler_params=pltpu.CompilerParams(
            dimension_semantics=("parallel",),
            vmem_limit_bytes=vmem_limit,
        ),
    )(s_p, a_p, arrs["wi"], arrs["bi"], arrs["emb"], arrs["wh"], arrs["bh"])

    reward = out[:B, :reward_size]
    term = out[:B, reward_size:reward_size + term_size]
    action = out[:B, reward_size + term_size:head]
    return reward, term, action


def init_params(key, agent_action_size, hidden_size, state_size,
                user_action_size, reward_size=1, termination_size=1):
    ks = jax.random.split(key, 9)
    scale = 0.1
    # Linear weights stored transposed: (in_features, out_features).
    return {
        "wi": scale * jax.random.normal(ks[0], (state_size, hidden_size), jnp.float32),
        "bi": scale * jax.random.normal(ks[1], (1, hidden_size), jnp.float32),
        "emb": scale * jax.random.normal(ks[2], (agent_action_size, hidden_size), jnp.float32),
        "wr": scale * jax.random.normal(ks[3], (hidden_size, reward_size), jnp.float32),
        "br": scale * jax.random.normal(ks[4], (1, reward_size), jnp.float32),
        "wt": scale * jax.random.normal(ks[5], (hidden_size, termination_size), jnp.float32),
        "bt": scale * jax.random.normal(ks[6], (1, termination_size), jnp.float32),
        "wa": scale * jax.random.normal(ks[7], (hidden_size, user_action_size), jnp.float32),
        "ba": scale * jax.random.normal(ks[8], (1, user_action_size), jnp.float32),
    }


def reference_forward(s, a, params):
    """Pure-JAX f32 reference matching the PyTorch forward()."""
    h_s = s @ params["wi"] + params["bi"]
    h_a = params["emb"][a[:, 0]]
    h = jnp.tanh(h_s + h_a)
    reward = h @ params["wr"] + params["br"]
    term = h @ params["wt"] + params["bt"]
    logits = h @ params["wa"] + params["ba"]
    action = jax.nn.log_softmax(logits, axis=1)
    return reward, term, action


if __name__ == "__main__":
    # Small, forward-consistent shapes.
    batch = 8
    state_size = 32
    hidden_size = 32
    agent_action_size = 16
    user_action_size = 32
    reward_size = 1
    termination_size = 1

    key = jax.random.PRNGKey(0)
    k_params, k_s, k_a = jax.random.split(key, 3)

    params = init_params(k_params, agent_action_size, hidden_size, state_size,
                         user_action_size, reward_size, termination_size)
    prepared = prepare_params(params)   # one-time: padding / fusion / bf16 cast

    s = jax.random.normal(k_s, (batch, state_size), jnp.float32)
    a = jax.random.randint(k_a, (batch, 1), 0, agent_action_size, jnp.int32)

    reward, term, action = simulator_forward(s, a, prepared)
    jax.block_until_ready((reward, term, action))

    # Sanity check against pure-JAX f32 reference (loose tolerance: kernel
    # uses bf16 MXU operands with f32 accumulation).
    r_ref, t_ref, a_ref = reference_forward(s, a, params)
    assert reward.shape == r_ref.shape and term.shape == t_ref.shape and action.shape == a_ref.shape
    assert jnp.allclose(reward, r_ref, atol=5e-2, rtol=5e-2), "reward mismatch"
    assert jnp.allclose(term, t_ref, atol=5e-2, rtol=5e-2), "term mismatch"
    assert jnp.allclose(action, a_ref, atol=5e-2, rtol=5e-2), "action mismatch"

    print("KERNEL_OK")
</pallas_src>

<mosaic_0001>
module attributes {stable_mosaic.version = 11 : i64} {
  func.func @simulator_kernel(%arg0: i32, %arg1: memref<8x32xbf16, #tpu.memory_space<vmem>>, %arg2: memref<8x1xi32, #tpu.memory_space<vmem>>, %arg3: memref<32x128xbf16, #tpu.memory_space<vmem>>, %arg4: memref<1x128xf32, #tpu.memory_space<vmem>>, %arg5: memref<16x128xbf16, #tpu.memory_space<vmem>>, %arg6: memref<128x128xbf16, #tpu.memory_space<vmem>>, %arg7: memref<1x128xf32, #tpu.memory_space<vmem>>, %arg8: memref<8x128xf32, #tpu.memory_space<vmem>>) attributes {dimension_semantics = [#tpu.dimension_semantics<parallel>], iteration_bounds = array<i64: 1>, scalar_prefetch = 0 : i64, scratch_operands = 0 : i64, tpu.core_type = #tpu.core_type<tc>, window_params = [{transform_indices = @transform_0, window_bounds = array<i64: 8, 32>}, {transform_indices = @transform_1, window_bounds = array<i64: 8, 1>}, {pipeline_mode = #tpu.pipeline_mode<synchronous>, transform_indices = @transform_2, window_bounds = array<i64: 32, 128>}, {pipeline_mode = #tpu.pipeline_mode<synchronous>, transform_indices = @transform_3, window_bounds = array<i64: 1, 128>}, {pipeline_mode = #tpu.pipeline_mode<synchronous>, transform_indices = @transform_4, window_bounds = array<i64: 16, 128>}, {pipeline_mode = #tpu.pipeline_mode<synchronous>, transform_indices = @transform_5, window_bounds = array<i64: 128, 128>}, {pipeline_mode = #tpu.pipeline_mode<synchronous>, transform_indices = @transform_6, window_bounds = array<i64: 1, 128>}, {transform_indices = @transform_7, window_bounds = array<i64: 8, 128>}]} {
    %c0 = arith.constant 0 : index
    %c0_0 = arith.constant 0 : index
    %0 = vector.load %arg1[%c0, %c0_0] : memref<8x32xbf16, #tpu.memory_space<vmem>>, vector<8x32xbf16>
    %c0_1 = arith.constant 0 : index
    %c0_2 = arith.constant 0 : index
    %1 = vector.load %arg2[%c0_1, %c0_2] : memref<8x1xi32, #tpu.memory_space<vmem>>, vector<8x1xi32>
    %c0_3 = arith.constant 0 : index
    %c0_4 = arith.constant 0 : index
    %2 = vector.load %arg3[%c0_3, %c0_4] : memref<32x128xbf16, #tpu.memory_space<vmem>>, vector<32x128xbf16>
    %cst = arith.constant dense<0.000000e+00> : vector<8x128xf32>
    %3 = tpu.matmul %0, %2, %cst {dimension_numbers = #tpu.dot_dimension_numbers<[1], [0], [0], [1], [0, 0, 1, 1], [], []>} : vector<8x32xbf16>, vector<32x128xbf16>, vector<8x128xf32> -> vector<8x128xf32>
    %4 = tpu.iota {dimensions = array<i32: 1>} : vector<8x16xi32>
    %5 = vector.broadcast %1 : vector<8x1xi32> to vector<8x16xi32>
    %6 = arith.cmpi eq, %5, %4 : vector<8x16xi32>
    %7 = arith.extui %6 : vector<8x16xi1> to vector<8x16xi32>
    %8 = arith.sitofp %7 : vector<8x16xi32> to vector<8x16xf32>
    %9 = arith.truncf %8 : vector<8x16xf32> to vector<8x16xbf16>
    %c0_5 = arith.constant 0 : index
    %c0_6 = arith.constant 0 : index
    %10 = vector.load %arg5[%c0_5, %c0_6] : memref<16x128xbf16, #tpu.memory_space<vmem>>, vector<16x128xbf16>
    %cst_7 = arith.constant dense<0.000000e+00> : vector<8x128xf32>
    %11 = tpu.matmul %9, %10, %cst_7 {dimension_numbers = #tpu.dot_dimension_numbers<[1], [0], [0], [1], [0, 0, 1, 1], [], []>} : vector<8x16xbf16>, vector<16x128xbf16>, vector<8x128xf32> -> vector<8x128xf32>
    %12 = arith.addf %3, %11 : vector<8x128xf32>
    %c0_8 = arith.constant 0 : index
    %c0_9 = arith.constant 0 : index
    %13 = vector.load %arg4[%c0_8, %c0_9] : memref<1x128xf32, #tpu.memory_space<vmem>>, vector<1x128xf32>
    %14 = vector.broadcast %13 : vector<1x128xf32> to vector<8x128xf32>
    %15 = arith.addf %12, %14 : vector<8x128xf32>
    %16 = math.tanh %15 : vector<8x128xf32>
    %17 = arith.truncf %16 : vector<8x128xf32> to vector<8x128xbf16>
    %c0_10 = arith.constant 0 : index
    %c0_11 = arith.constant 0 : index
    %18 = vector.load %arg6[%c0_10, %c0_11] : memref<128x128xbf16, #tpu.memory_space<vmem>>, vector<128x128xbf16>
    %cst_12 = arith.constant dense<0.000000e+00> : vector<8x128xf32>
    %19 = tpu.matmul %17, %18, %cst_12 {dimension_numbers = #tpu.dot_dimension_numbers<[1], [0], [0], [1], [0, 0, 1, 1], [], []>} : vector<8x128xbf16>, vector<128x128xbf16>, vector<8x128xf32> -> vector<8x128xf32>
    %c0_13 = arith.constant 0 : index
    %c0_14 = arith.constant 0 : index
    %20 = vector.load %arg7[%c0_13, %c0_14] : memref<1x128xf32, #tpu.memory_space<vmem>>, vector<1x128xf32>
    %21 = vector.broadcast %20 : vector<1x128xf32> to vector<8x128xf32>
    %22 = arith.addf %19, %21 : vector<8x128xf32>
    %23 = tpu.iota {dimensions = array<i32: 1>} : vector<8x128xi32>
    %c0_i32 = arith.constant 0 : i32
    %24 = vector.broadcast %c0_i32 : i32 to vector<8x128xi32>
    %25 = arith.addi %23, %24 : vector<8x128xi32>
    %c2_i32 = arith.constant 2 : i32
    %26 = vector.broadcast %c2_i32 : i32 to vector<8x128xi32>
    %27 = arith.cmpi sge, %25, %26 : vector<8x128xi32>
    %c34_i32 = arith.constant 34 : i32
    %28 = vector.broadcast %c34_i32 : i32 to vector<8x128xi32>
    %29 = arith.cmpi slt, %25, %28 : vector<8x128xi32>
    %30 = arith.andi %27, %29 : vector<8x128xi1>
    %cst_15 = arith.constant -1.000000e+30 : f32
    %31 = vector.broadcast %cst_15 : f32 to vector<8x128xf32>
    %32 = arith.select %30, %22, %31 : vector<8x128xi1>, vector<8x128xf32>
    %cst_16 = arith.constant dense<0xFF800000> : vector<8xf32>
    %33 = vector.multi_reduction <maximumf>, %32, %cst_16 [1] : vector<8x128xf32> to vector<8xf32>
    %34 = vector.shape_cast %33 : vector<8xf32> to vector<8x1xf32>
    %35 = vector.broadcast %34 : vector<8x1xf32> to vector<8x128xf32>
    %36 = arith.subf %32, %35 : vector<8x128xf32>
    %37 = math.exp %36 : vector<8x128xf32>
    %cst_17 = arith.constant dense<0.000000e+00> : vector<8xf32>
    %38 = vector.multi_reduction <add>, %37, %cst_17 [1] : vector<8x128xf32> to vector<8xf32>
    %39 = vector.shape_cast %38 : vector<8xf32> to vector<8x1xf32>
    %40 = math.log %39 : vector<8x1xf32>
    %41 = arith.addf %40, %34 : vector<8x1xf32>
    %42 = tpu.iota {dimensions = array<i32: 1>} : vector<8x128xi32>
    %c2_i32_18 = arith.constant 2 : i32
    %43 = vector.broadcast %c2_i32_18 : i32 to vector<8x128xi32>
    %44 = arith.cmpi sge, %42, %43 : vector<8x128xi32>
    %c34_i32_19 = arith.constant 34 : i32
    %45 = vector.broadcast %c34_i32_19 : i32 to vector<8x128xi32>
    %46 = arith.cmpi slt, %42, %45 : vector<8x128xi32>
    %47 = arith.andi %44, %46 : vector<8x128xi1>
    %48 = vector.broadcast %41 : vector<8x1xf32> to vector<8x128xf32>
    %49 = arith.subf %22, %48 : vector<8x128xf32>
    %50 = arith.select %47, %49, %22 : vector<8x128xi1>, vector<8x128xf32>
    %c0_20 = arith.constant 0 : index
    %c0_21 = arith.constant 0 : index
    %51 = vector.load %arg8[%c0_20, %c0_21] : memref<8x128xf32, #tpu.memory_space<vmem>>, vector<8x128xf32>
    tpu.vector_store %arg8[%c0_20, %c0_21], %50 {strides = array<i32>} : memref<8x128xf32, #tpu.memory_space<vmem>>, vector<8x128xf32>,
    return
  }
  func.func @transform_0(%arg0: i32) -> (i32, i32) {
    %c0_i32 = arith.constant 0 : i32
    %c0_i32_0 = arith.constant 0 : i32
    return %arg0, %c0_i32 : i32, i32
  }
  func.func @transform_1(%arg0: i32) -> (i32, i32) {
    %c0_i32 = arith.constant 0 : i32
    %c0_i32_0 = arith.constant 0 : i32
    return %arg0, %c0_i32 : i32, i32
  }
  func.func @transform_2(%arg0: i32) -> (i32, i32) {
    %c0_i32 = arith.constant 0 : i32
    %c0_i32_0 = arith.constant 0 : i32
    %c0_i32_1 = arith.constant 0 : i32
    return %c0_i32, %c0_i32_0 : i32, i32
  }
  func.func @transform_3(%arg0: i32) -> (i32, i32) {
    %c0_i32 = arith.constant 0 : i32
    %c0_i32_0 = arith.constant 0 : i32
    %c0_i32_1 = arith.constant 0 : i32
    return %c0_i32, %c0_i32_0 : i32, i32
  }
  func.func @transform_4(%arg0: i32) -> (i32, i32) {
    %c0_i32 = arith.constant 0 : i32
    %c0_i32_0 = arith.constant 0 : i32
    %c0_i32_1 = arith.constant 0 : i32
    return %c0_i32, %c0_i32_0 : i32, i32
  }
  func.func @transform_5(%arg0: i32) -> (i32, i32) {
    %c0_i32 = arith.constant 0 : i32
    %c0_i32_0 = arith.constant 0 : i32
    %c0_i32_1 = arith.constant 0 : i32
    return %c0_i32, %c0_i32_0 : i32, i32
  }
  func.func @transform_6(%arg0: i32) -> (i32, i32) {
    %c0_i32 = arith.constant 0 : i32
    %c0_i32_0 = arith.constant 0 : i32
    %c0_i32_1 = arith.constant 0 : i32
    return %c0_i32, %c0_i32_0 : i32, i32
  }
  func.func @transform_7(%arg0: i32) -> (i32, i32) {
    %c0_i32 = arith.constant 0 : i32
    %c0_i32_0 = arith.constant 0 : i32
    return %arg0, %c0_i32 : i32, i32
  }
}

</mosaic_0001>

<llo_original>
// kernel: tpu_custom_call.1
$region0: #{tpu_custom_call.1}
  #allocation0 [shape = 'u32[]', space=smem, size = 0x4, offset = 0x4, fixed_abs, tag = 'smem constant byte address 0x4 - core index']
  #allocation1 [shape = 'u32[144,128]{1,0:T(1,128)}', space=vmem, size = 0x12000, scoped, tag = 'internal scratch']
  %s0 = inlined_call_operand.vmem [shape: bf16[8,32], index: 0, kind: input, shape index: {}]
  %s1 = inlined_call_operand.vmem [shape: s32[8,1], index: 1, kind: input, shape index: {}]
  %s2 = inlined_call_operand.hbm [shape: bf16[32,128], index: 2, kind: input, shape index: {}]
  %s3 = inlined_call_operand.vmem [shape: f32[1,128], index: 3, kind: input, shape index: {}]
  %s4 = inlined_call_operand.vmem [shape: bf16[16,128], index: 4, kind: input, shape index: {}]
  %s5 = inlined_call_operand.hbm [shape: bf16[128,128], index: 5, kind: input, shape index: {}]
  %s6 = inlined_call_operand.vmem [shape: f32[1,128], index: 6, kind: input, shape index: {}]
  %s7 = inlined_call_operand.hbm [shape: f32[8,128], index: 7, kind: output, shape index: {}]
  %s8 = sld [smem:[#allocation0]]
  $region46: #{tpu_custom_call.1} parent=0
    _
  %s10 = ssub.s32 1, %s8
  %s11 = scalar_select 0, %s10, %s8
  $region1: #{tpu_custom_call.1} parent=0
    #allocation2 [shape = 'u8[8192]{0}', space=vmem, size = 0x2000, scoped, tag = 'input window, operand 2, single buffered']
    #allocation3 [shape = 's32[1]{0}', space=sflag, size = 0x4, scoped, tag = 'scoped memory for tpu_custom_call.1']
    #allocation4 [shape = 's32[1]{0}', space=sflag, size = 0x4, scoped, tag = 'scoped memory for tpu_custom_call.1']
    #allocation5 [shape = 'u8[32768]{0}', space=vmem, size = 0x8000, scoped, tag = 'input window, operand 5, single buffered']
    #allocation6 [shape = 's32[1]{0}', space=sflag, size = 0x4, scoped, tag = 'scoped memory for tpu_custom_call.1']
    #allocation7 [shape = 'u8[4096]{0}', space=vmem, size = 0x1000, scoped, tag = 'output window, operand 0, single buffered']
    %12 = vsyncpa [#allocation3], 0
    %13 = vsyncpa [#allocation6], 0
    %14 = vsyncpa [#allocation4], 0
    // Predicated region
    $region2: #{tpu_custom_call.1} parent=1 // pred_check
      _
    $region3: #{tpu_custom_call.1} parent=1 // pred_check_branch
      %16 = sbr.rel (0) target = $region5
    $region4: #{tpu_custom_call.1} parent=1 // pred_region
      _
    $region5: #{tpu_custom_call.1} parent=1 // pred_fallthru
      _
    // Predicated region
    $region6: #{tpu_custom_call.1} parent=1 // pred_check
      _
    $region7: #{tpu_custom_call.1} parent=1 // pred_check_branch
      %18 = sbr.rel (0) target = $region9
    $region8: #{tpu_custom_call.1} parent=1 // pred_region
      _
    $region9: #{tpu_custom_call.1} parent=1 // pred_fallthru
      _
    // Predicated region
    $region10: #{tpu_custom_call.1} parent=1 // pred_check
      _
    $region11: #{tpu_custom_call.1} parent=1 // pred_check_branch
      %20 = sbr.rel (0) target = $region13
    $region12: #{tpu_custom_call.1} parent=1 // pred_region
      %s22 = ssub.s32 256, 256
      %23 = vsyncadd [#allocation3], %s22
      %s24 = sshll.u32 [#allocation2], 4
      %s25 = int_to_ptr.vmem [resolvable:$true] %s24
      %30 = dma.hbm_to_vmem [thread:$0]  %s2, 256, %s25, [#allocation3], 64, 64, 4
    $region13: #{tpu_custom_call.1} parent=1 // pred_fallthru
      _
    // Predicated region
    $region14: #{tpu_custom_call.1} parent=1 // pred_check
      _
    $region15: #{tpu_custom_call.1} parent=1 // pred_check_branch
      %32 = sbr.rel (0) target = $region17
    $region16: #{tpu_custom_call.1} parent=1 // pred_region
      _
    $region17: #{tpu_custom_call.1} parent=1 // pred_fallthru
      _
    // Predicated region
    $region18: #{tpu_custom_call.1} parent=1 // pred_check
      _
    $region19: #{tpu_custom_call.1} parent=1 // pred_check_branch
      %34 = sbr.rel (0) target = $region21
    $region20: #{tpu_custom_call.1} parent=1 // pred_region
      _
    $region21: #{tpu_custom_call.1} parent=1 // pred_fallthru
      _
    // Predicated region
    $region22: #{tpu_custom_call.1} parent=1 // pred_check
      _
    $region23: #{tpu_custom_call.1} parent=1 // pred_check_branch
      %36 = sbr.rel (0) target = $region25
    $region24: #{tpu_custom_call.1} parent=1 // pred_region
      %s38 = ssub.s32 1024, 1024
      %39 = vsyncadd [#allocation6], %s38
      %s40 = sshll.u32 [#allocation5], 4
      %s41 = int_to_ptr.vmem [resolvable:$true] %s40
      %46 = dma.hbm_to_vmem [thread:$0]  %s5, 1024, %s41, [#allocation6], 64, 64, 4
    $region25: #{tpu_custom_call.1} parent=1 // pred_fallthru
      _
    // Predicated region
    $region26: #{tpu_custom_call.1} parent=1 // pred_check
      _
    $region27: #{tpu_custom_call.1} parent=1 // pred_check_branch
      %48 = sbr.rel (0) target = $region29
    $region28: #{tpu_custom_call.1} parent=1 // pred_region
      _
    $region29: #{tpu_custom_call.1} parent=1 // pred_fallthru
      _
    // Predicated region
    $region30: #{tpu_custom_call.1} parent=1 // pred_check
      _
    $region31: #{tpu_custom_call.1} parent=1 // pred_check_branch
      %50 = sbr.rel (0) target = $region33
    $region32: #{tpu_custom_call.1} parent=1 // pred_region
      %51 = dma.done [#allocation3], 256
    $region33: #{tpu_custom_call.1} parent=1 // pred_fallthru
      _
    // Predicated region
    $region34: #{tpu_custom_call.1} parent=1 // pred_check
      _
    $region35: #{tpu_custom_call.1} parent=1 // pred_check_branch
      %53 = sbr.rel (0) target = $region37
    $region36: #{tpu_custom_call.1} parent=1 // pred_region
      %54 = dma.done [#allocation6], 1024
    $region37: #{tpu_custom_call.1} parent=1 // pred_fallthru
      _
    %v56 = vld [vmem:[%s0] sm:$0xf]
    %v57 = vld [vmem:[%s1] sm:$0xff]
    %v58 = vld [vmem:[#allocation2] sm:$0xf]
    %v59 = vld [vmem:[#allocation2 + $0x4] sm:$0xf]
    %v60 = vld [vmem:[#allocation2 + $0x8] sm:$0xf]
    %v61 = vld [vmem:[#allocation2 + $0xc] sm:$0xf]
    %v62 = vlaneseq
    %v63 = vand.u32 %v62, 127
    %64 = vset.pattern.permute.xlu0 0
    %65 = vperm.xlu0 %64, %v57
    %v66 = vpop.permute.xlu0 %65
    %vm67 = vcmp.eq.s32.totalorder %v66, %v63
    %v68 = vsel %vm67, 1, 0
    %v69 = vcvt.s32.f32 %v68
    %v70 = vpack.c.bf16 %v69, %v69
    %v71 = vld [vmem:[%s4] sm:$0xf]
    %v72 = vld [vmem:[%s4 + $0x4] sm:$0xf]
    %v75 = vunpack.c.l.b16 %v71
    %v76 = vunpack.c.l.b16 %v72
    %v77 = vpack.c.b16 %v76, %v75
    %vm79 = vcmask 130048
    %v81 = vsel %vm79, %v70, 0
    %83 = vmatprep.subr.bf16.mxu0 0
    %84 = vmatpush1.bf16.msra.mxu0 0
    %85 = vmatprep.subr.bf16.mxu0 0
    %86 = vmatpush1.bf16.msra.mxu0 0
    %87 = vmatprep.subr.bf16.mxu0 0
    %88 = vmatpush1.bf16.msra.mxu0 0
    %89 = vmatprep.subr.bf16.mxu0 0
    %90 = vmatpush1.bf16.msra.mxu0 0
    %91 = vmatprep.subr.bf16.mxu0 0
    %92 = vmatpush1.bf16.msra.mxu0 0
    %93 = vmatprep.subr.bf16.mxu0 0
    %94 = vmatpush1.bf16.msra.mxu0 0
    %95 = vmatprep.subr.bf16.mxu0 0
    %96 = vmatpush1.bf16.msra.mxu0 0
    %97 = vmatprep.subr.bf16.mxu0 0
    %98 = vmatpush1.bf16.msra.mxu0 %v77
    %99 = vmatprep.subr.bf16.mxu0 0
    %100 = vmatpush2.bf16.msra.mxu0 0
    %101 = vmatprep.subr.bf16.mxu0 0
    %102 = vmatpush2.bf16.msra.mxu0 0
    %103 = vmatprep.subr.bf16.mxu0 0
    %104 = vmatpush2.bf16.msra.mxu0 0
    %105 = vmatprep.subr.bf16.mxu0 0
    %106 = vmatpush2.bf16.msra.mxu0 0
    %107 = vmatprep.subr.bf16.mxu0 0
    %108 = vmatpush2.bf16.msra.mxu0 0
    %109 = vmatprep.subr.bf16.mxu0 0
    %110 = vmatpush2.bf16.msra.mxu0 0
    %111 = vmatprep.subr.bf16.mxu0 0
    %112 = vmatpush2.bf16.msra.mxu0 0
    %113 = vmatprep.subr.bf16.mxu0 0
    %114 = vmatpush2.bf16.msra.mxu0 0
    %115 = vmatprep.mubr.bf16.mxu0 0
    %116 = vmatmul.mubr.bf16.gmra.mxu0 %v81
    %v117 = vpop.f32.mrf.mxu0
    %v118 = vadd.f32 0.0, %v117
    %v119 = vpop.f32.mrf.mxu0
    %v120 = vpop.f32.mrf.mxu0
    %v121 = vpop.f32.mrf.mxu0
    %122 = vdwg.mxu0
    %v127 = vunpack.c.l.b16 %v58
    %v128 = vunpack.c.l.b16 %v59
    %v129 = vunpack.c.l.b16 %v60
    %v130 = vunpack.c.l.b16 %v61
    %v131 = vpack.c.b16 %v128, %v127
    %v132 = vpack.c.b16 %v130, %v129
    %vm135 = vcmask 261120
    %v137 = vsel %vm135, %v56, 0
    %139 = vmatprep.subr.bf16.mxu0 0
    %140 = vmatpush1.bf16.msra.mxu0 0
    %141 = vmatprep.subr.bf16.mxu0 0
    %142 = vmatpush1.bf16.msra.mxu0 0
    %143 = vmatprep.subr.bf16.mxu0 0
    %144 = vmatpush1.bf16.msra.mxu0 0
    %145 = vmatprep.subr.bf16.mxu0 0
    %146 = vmatpush1.bf16.msra.mxu0 0
    %147 = vmatprep.subr.bf16.mxu0 0
    %148 = vmatpush1.bf16.msra.mxu0 0
    %149 = vmatprep.subr.bf16.mxu0 0
    %150 = vmatpush1.bf16.msra.mxu0 0
    %151 = vmatprep.subr.bf16.mxu0 0
    %152 = vmatpush1.bf16.msra.mxu0 %v132
    %153 = vmatprep.subr.bf16.mxu0 0
    %154 = vmatpush1.bf16.msra.mxu0 %v131
    %155 = vmatprep.subr.bf16.mxu0 0
    %156 = vmatpush2.bf16.msra.mxu0 0
    %157 = vmatprep.subr.bf16.mxu0 0
    %158 = vmatpush2.bf16.msra.mxu0 0
    %159 = vmatprep.subr.bf16.mxu0 0
    %160 = vmatpush2.bf16.msra.mxu0 0
    %161 = vmatprep.subr.bf16.mxu0 0
    %162 = vmatpush2.bf16.msra.mxu0 0
    %163 = vmatprep.subr.bf16.mxu0 0
    %164 = vmatpush2.bf16.msra.mxu0 0
    %165 = vmatprep.subr.bf16.mxu0 0
    %166 = vmatpush2.bf16.msra.mxu0 0
    %167 = vmatprep.subr.bf16.mxu0 0
    %168 = vmatpush2.bf16.msra.mxu0 0
    %169 = vmatprep.subr.bf16.mxu0 0
    %170 = vmatpush2.bf16.msra.mxu0 0
    %171 = vmatprep.mubr.bf16.mxu0 0
    %172 = vmatmul.mubr.bf16.gmra.mxu0 %v137
    %v173 = vpop.f32.mrf.mxu0
    %v174 = vadd.f32 %v118, %v173
    %v175 = vpop.f32.mrf.mxu0
    %v176 = vpop.f32.mrf.mxu0
    %v177 = vpop.f32.mrf.mxu0
    %178 = vdwg.mxu0
    %v179 = vld [vmem:[%s3] sm:$0x1]
    %v181 = vlaneseq
    %v182 = vshrl.u32 %v181, 7
    %v183 = vsub.s32 0, %v182
    %v184 = vrot.slane %v179, %v183
    %v186 = vadd.f32 %v174, %v184
    %v187 = vtanh.pop %v186
    %v188 = vpack.c.bf16 %v187, %v187
    %v189 = vld [vmem:[#allocation5] sm:$0xf]
    %v190 = vld [vmem:[#allocation5 + $0x4] sm:$0xf]
    %v191 = vld [vmem:[#allocation5 + $0x8] sm:$0xf]
    %v192 = vld [vmem:[#allocation5 + $0xc] sm:$0xf]
    %v193 = vld [vmem:[#allocation5 + $0x10] sm:$0xf]
    %v194 = vld [vmem:[#allocation5 + $0x14] sm:$0xf]
    %v195 = vld [vmem:[#allocation5 + $0x18] sm:$0xf]
    %v196 = vld [vmem:[#allocation5 + $0x1c] sm:$0xf]
    %v197 = vld [vmem:[#allocation5 + $0x20] sm:$0xf]
    %v198 = vld [vmem:[#allocation5 + $0x24] sm:$0xf]
    %v199 = vld [vmem:[#allocation5 + $0x28] sm:$0xf]
    %v200 = vld [vmem:[#allocation5 + $0x2c] sm:$0xf]
    %v201 = vld [vmem:[#allocation5 + $0x30] sm:$0xf]
    %v202 = vld [vmem:[#allocation5 + $0x34] sm:$0xf]
    %v203 = vld [vmem:[#allocation5 + $0x38] sm:$0xf]
    %v204 = vld [vmem:[#allocation5 + $0x3c] sm:$0xf]
    %v205 = vld [vmem:[%s6] sm:$0x1]
    %v207 = vlaneseq
    %v208 = vshrl.u32 %v207, 7
    %v209 = vsub.s32 0, %v208
    %v210 = vrot.slane %v205, %v209
    %v228 = vunpack.c.l.b16 %v189
    %v229 = vunpack.c.l.b16 %v190
    %v230 = vunpack.c.l.b16 %v191
    %v231 = vunpack.c.l.b16 %v192
    %v232 = vunpack.c.l.b16 %v193
    %v233 = vunpack.c.l.b16 %v194
    %v234 = vunpack.c.l.b16 %v195
    %v235 = vunpack.c.l.b16 %v196
    %v236 = vunpack.c.l.b16 %v197
    %v237 = vunpack.c.l.b16 %v198
    %v238 = vunpack.c.l.b16 %v199
    %v239 = vunpack.c.l.b16 %v200
    %v240 = vunpack.c.l.b16 %v201
    %v241 = vunpack.c.l.b16 %v202
    %v242 = vunpack.c.l.b16 %v203
    %v243 = vunpack.c.l.b16 %v204
    %v244 = vpack.c.b16 %v229, %v228
    %v245 = vpack.c.b16 %v231, %v230
    %v246 = vpack.c.b16 %v233, %v232
    %v247 = vpack.c.b16 %v235, %v234
    %v248 = vpack.c.b16 %v237, %v236
    %v249 = vpack.c.b16 %v239, %v238
    %v250 = vpack.c.b16 %v241, %v240
    %v251 = vpack.c.b16 %v243, %v242
    %260 = vmatprep.subr.bf16.mxu0 0
    %261 = vmatpush1.bf16.msra.mxu0 %v251
    %262 = vmatprep.subr.bf16.mxu0 0
    %263 = vmatpush1.bf16.msra.mxu0 %v250
    %264 = vmatprep.subr.bf16.mxu0 0
    %265 = vmatpush1.bf16.msra.mxu0 %v249
    %266 = vmatprep.subr.bf16.mxu0 0
    %267 = vmatpush1.bf16.msra.mxu0 %v248
    %268 = vmatprep.subr.bf16.mxu0 0
    %269 = vmatpush1.bf16.msra.mxu0 %v247
    %270 = vmatprep.subr.bf16.mxu0 0
    %271 = vmatpush1.bf16.msra.mxu0 %v246
    %272 = vmatprep.subr.bf16.mxu0 0
    %273 = vmatpush1.bf16.msra.mxu0 %v245
    %274 = vmatprep.subr.bf16.mxu0 0
    %275 = vmatpush1.bf16.msra.mxu0 %v244
    %276 = vmatprep.subr.bf16.mxu0 0
    %277 = vmatpush2.bf16.msra.mxu0 0
    %278 = vmatprep.subr.bf16.mxu0 0
    %279 = vmatpush2.bf16.msra.mxu0 0
    %280 = vmatprep.subr.bf16.mxu0 0
    %281 = vmatpush2.bf16.msra.mxu0 0
    %282 = vmatprep.subr.bf16.mxu0 0
    %283 = vmatpush2.bf16.msra.mxu0 0
    %284 = vmatprep.subr.bf16.mxu0 0
    %285 = vmatpush2.bf16.msra.mxu0 0
    %286 = vmatprep.subr.bf16.mxu0 0
    %287 = vmatpush2.bf16.msra.mxu0 0
    %288 = vmatprep.subr.bf16.mxu0 0
    %289 = vmatpush2.bf16.msra.mxu0 0
    %290 = vmatprep.subr.bf16.mxu0 0
    %291 = vmatpush2.bf16.msra.mxu0 0
    %292 = vmatprep.mubr.bf16.mxu0 0
    %293 = vmatmul.mubr.bf16.gmra.mxu0 %v188
    %v294 = vpop.f32.mrf.mxu0
    %v295 = vadd.f32 %v210, %v294
    %v296 = vpop.f32.mrf.mxu0
    %v297 = vpop.f32.mrf.mxu0
    %v298 = vpop.f32.mrf.mxu0
    %299 = vdwg.mxu0
    %vm300 = vcmp.ge.s32.totalorder %v63, 2
    %vm301 = vcmp.lt.s32.totalorder %v63, 34
    %vm302 = vmand %vm300, %vm301
    %v303 = vsel %vm302, %v295, -1e+30
    %304 = vmax.xlane.f32.xlu0 %v303
    %v305 = vpop.xlane.xlu0 %304
    %v306 = vsub.f32 %v303, %v305
    %v307 = vmul.f32 %v306, 1.442695
    %v308 = vpow.pop %v307
    %309 = vadd.xlane.f32.xlu0 %v308
    %v310 = vpop.xlane.xlu0 %309
    %v311 = vlog2.pop %v310
    %v312 = vmul.f32 %v311, 0.6931472
    %v313 = vadd.f32 %v312, %v305
    %v314 = vsub.f32 %v295, %v313
    %v315 = vsel %vm302, %v314, %v295
    %316 = vst [vmem:[#allocation7] sm:$0xff] %v315
    // Predicated region
    $region38: #{tpu_custom_call.1} parent=1 // pred_check
      _
    $region39: #{tpu_custom_call.1} parent=1 // pred_check_branch
      %318 = sbr.rel (0) target = $region41
    $region40: #{tpu_custom_call.1} parent=1 // pred_region
      %s320 = ssub.s32 128, 128
      %321 = vsyncadd [#allocation4], %s320
      %s323 = sshll.u32 [#allocation7], 4
      %s324 = int_to_ptr.vmem [resolvable:$true] %s323
      %326 = dma.vmem_to_hbm [thread:$0]  %s324, 128, %s7, [#allocation4]
    $region41: #{tpu_custom_call.1} parent=1 // pred_fallthru
      _
    // Predicated region
    $region42: #{tpu_custom_call.1} parent=1 // pred_check
      _
    $region43: #{tpu_custom_call.1} parent=1 // pred_check_branch
      %328 = sbr.rel (0) target = $region45
    $region44: #{tpu_custom_call.1} parent=1 // pred_region
      %329 = dma.done [#allocation4], 128
    $region45: #{tpu_custom_call.1} parent=1 // pred_fallthru
      _
    %330 = vsyncpa [#allocation3], 1
    %331 = vsyncpa [#allocation6], 1
    %332 = vsyncpa [#allocation4], 1

</llo_original>
